<compile_context>
chip_gen: v7x
topology: tpu7x:2x2x1
jax: 0.10.0
libtpu: 0.0.40
codegen_flags: <defaults>
</compile_context>

<pallas_src>
import numpy as np
import jax
import jax.numpy as jnp
from jax.experimental import pallas as pl
from jax.experimental.pallas import tpu as pltpu

_LANES = 128            # bin axis padded to one full vreg of lanes
_N_CORES = 2            # leading "parallel" grid axis (v7x: 2 TCs; harmless on 1-TC chips)
_MAX_TILE_ROWS = 8192   # cap on the sublane extent of the [tile_n, 128] bin path


def _round_up(a: int, b: int) -> int:
    return ((a + b - 1) // b) * b


def _round_down(a: int, b: int) -> int:
    return (a // b) * b


def _cdiv(a: int, b: int) -> int:
    return (a + b - 1) // b


def _vmem_capacity_bytes() -> int:
    try:
        return int(pltpu.get_tpu_info().vmem_capacity_bytes)
    except Exception:
        return 64 * 1024 * 1024   # conservative default (v7x-sized VMEM)


def _make_ece_kernel(n_total: int, tile_n: int, tiles_per_core: int,
                     n_classes: int, n_bins: int):
    def kernel(logits_ref, labels_ref, out_ref, stats_ref):
        core = pl.program_id(0)
        i = pl.program_id(1)

        @pl.when(i == 0)
        def _init():
            stats_ref[...] = jnp.zeros_like(stats_ref)

        x = logits_ref[...]                                   # [tile_n, C] f32
        labels = labels_ref[...]                              # [tile_n, 1] i32

        # confidence = max softmax prob = 1 / sum(exp(x - max(x)))   (exact)
        m = jnp.max(x, axis=1, keepdims=True)                 # [tile_n, 1]
        denom = jnp.sum(jnp.exp(x - m), axis=1, keepdims=True)
        conf = 1.0 / denom                                    # in (0, 1]

        # prediction = first argmax of the logits (min-of-iota over max mask)
        col = jax.lax.broadcasted_iota(jnp.int32, (tile_n, n_classes), 1)
        pred = jnp.min(jnp.where(x == m, col, n_classes), axis=1, keepdims=True)
        acc = (pred == labels).astype(jnp.float32)            # [tile_n, 1]

        # rows past the true batch size (padded last tiles) are invalid
        base = (core * tiles_per_core + i) * tile_n
        row = jax.lax.broadcasted_iota(jnp.int32, (tile_n, 1), 0) + base
        valid = row < n_total                                  # [tile_n, 1] bool

        # uniform bins => bin index = clamp(ceil(conf * n_bins) - 1, 0, nb-1);
        # invalid rows get an index that matches no lane at all.
        bidx = jnp.ceil(conf * jnp.float32(n_bins)).astype(jnp.int32) - 1
        bidx = jnp.clip(bidx, 0, n_bins - 1)
        bidx = jnp.where(valid, bidx, _LANES)                  # 128 -> no lane

        lane = jax.lax.broadcasted_iota(jnp.int32, (tile_n, _LANES), 1)
        in_bin = lane == bidx                                  # [tile_n, 128]

        cnt = jnp.sum(jnp.where(in_bin, 1.0, 0.0), axis=0, keepdims=True)
        csum = jnp.sum(jnp.where(in_bin, conf, 0.0), axis=0, keepdims=True)
        asum = jnp.sum(jnp.where(in_bin, acc, 0.0), axis=0, keepdims=True)

        # fused accumulator update: one RMW instead of three
        stats_ref[0:3, :] += jnp.concatenate([cnt, csum, asum], axis=0)

        @pl.when(i == pl.num_programs(1) - 1)
        def _fin():
            out_ref[0] = stats_ref[...]

    return kernel


def ece_pallas(logits: jax.Array, labels: jax.Array, n_bins: int = 15) -> jax.Array:
    """ECE forward. logits: [N, C] float, labels: [N] int. Returns (1,) f32."""
    n, c = logits.shape

    # ---- per-generation tile sizing / VMEM limit -------------------------
    vmem_cap = _vmem_capacity_bytes()
    vmem_limit = int(min(vmem_cap // 2, 48 * 1024 * 1024))    # v7x: 32 MiB, v5e/v6e: 48 MiB
    work_budget = vmem_limit // 2                             # headroom for Mosaic temps
    # per-row bytes: ~6 live [tile_n, C] f32/i32 arrays (double-buffered x,
    # x - m, exp, iota, argmax select) + ~4 KiB of [tile_n, 128] bin-path temps.
    per_row = 6 * 4 * c + 4096
    tile_cap = max(8, min(_MAX_TILE_ROWS, _round_down(work_budget // per_row, 8)))

    rows_per_core = _round_up(max(1, _cdiv(n, _N_CORES)), 8)
    tile_n = min(tile_cap, rows_per_core)
    tiles_per_core = _cdiv(rows_per_core, tile_n)
    n_pad = _N_CORES * tiles_per_core * tile_n

    logits_f = logits.astype(jnp.float32)
    labels_i = labels.astype(jnp.int32).reshape(n, 1)
    if n_pad != n:
        logits_f = jnp.pad(logits_f, ((0, n_pad - n), (0, 0)))
        labels_i = jnp.pad(labels_i, ((0, n_pad - n), (0, 0)), constant_values=-1)

    kernel = _make_ece_kernel(n, tile_n, tiles_per_core, c, n_bins)

    cost = pl.CostEstimate(
        flops=10 * n * c,
        transcendentals=n * c,
        bytes_accessed=n * (c + 1) * 4,
    )

    stats = pl.pallas_call(
        kernel,
        out_shape=jax.ShapeDtypeStruct((_N_CORES, 8, _LANES), jnp.float32),
        grid_spec=pltpu.PrefetchScalarGridSpec(
            num_scalar_prefetch=0,
            grid=(_N_CORES, tiles_per_core),
            in_specs=[
                pl.BlockSpec((tile_n, c),
                             lambda core, i: (core * tiles_per_core + i, 0)),
                pl.BlockSpec((tile_n, 1),
                             lambda core, i: (core * tiles_per_core + i, 0)),
            ],
            out_specs=pl.BlockSpec((1, 8, _LANES), lambda core, i: (core, 0, 0)),
            scratch_shapes=[pltpu.VMEM((8, _LANES), jnp.float32)],
        ),
        compiler_params=pltpu.CompilerParams(
            dimension_semantics=("parallel", "arbitrary"),
            vmem_limit_bytes=vmem_limit,
        ),
        cost_estimate=cost,
    )(logits_f, labels_i)

    # tiny 15-bin combine + final ECE scalar in plain JAX
    tot = jnp.sum(stats, axis=0)                # [8, 128]
    cnt = tot[0, :n_bins]
    csum = tot[1, :n_bins]
    asum = tot[2, :n_bins]
    safe = jnp.maximum(cnt, 1.0)
    term = jnp.abs(csum / safe - asum / safe) * (cnt / np.float32(n))
    ece = jnp.sum(jnp.where(cnt > 0.0, term, 0.0))
    return ece.reshape(1)


def ece_reference(logits, labels, n_bins: int = 15):
    """Pure-JAX reference mirroring the PyTorch ECE module."""
    probs = jax.nn.softmax(logits.astype(jnp.float32), axis=1)
    conf = jnp.max(probs, axis=1)
    pred = jnp.argmax(probs, axis=1)
    acc = (pred == labels).astype(jnp.float32)
    boundaries = np.linspace(0.0, 1.0, n_bins + 1, dtype=np.float32)
    ece = jnp.zeros((1,), dtype=jnp.float32)
    for lo, hi in zip(boundaries[:-1], boundaries[1:]):
        in_bin = (conf > lo) & (conf <= hi)
        cnt = jnp.sum(in_bin.astype(jnp.float32))
        prop = cnt / conf.shape[0]
        safe = jnp.maximum(cnt, 1.0)
        conf_in = jnp.sum(jnp.where(in_bin, conf, 0.0)) / safe
        acc_in = jnp.sum(jnp.where(in_bin, acc, 0.0)) / safe
        term = jnp.abs(conf_in - acc_in) * prop
        ece = ece + jnp.where(cnt > 0, term, 0.0)
    return ece


if __name__ == "__main__":
    key = jax.random.PRNGKey(0)
    k_logits, k_labels = jax.random.split(key)

    N, C = 64, 16  # batch of 64 samples, 16 classes
    logits = jax.random.normal(k_logits, (N, C), dtype=jnp.float32) * 2.0
    labels = jax.random.randint(k_labels, (N,), 0, C, dtype=jnp.int32)

    out = jax.block_until_ready(ece_pallas(logits, labels, n_bins=15))
    ref = jax.block_until_ready(ece_reference(logits, labels, n_bins=15))
    np.testing.assert_allclose(np.asarray(out), np.asarray(ref), rtol=1e-5, atol=1e-6)

    print("KERNEL_OK")
</pallas_src>

<mosaic_0001>
module attributes {stable_mosaic.version = 11 : i64} {
  func.func @kernel(%arg0: i32, %arg1: i32, %arg2: memref<32x16xf32, #tpu.memory_space<vmem>>, %arg3: memref<32x1xi32, #tpu.memory_space<vmem>>, %arg4: memref<1x8x128xf32, #tpu.memory_space<vmem>>, %arg5: memref<8x128xf32, #tpu.memory_space<vmem>>) attributes {dimension_semantics = [#tpu.dimension_semantics<parallel>, #tpu.dimension_semantics<arbitrary>], iteration_bounds = array<i64: 2, 1>, scalar_prefetch = 0 : i64, scratch_operands = 1 : i64, tpu.core_type = #tpu.core_type<tc>, window_params = [{transform_indices = @transform_0, window_bounds = array<i64: 32, 16>}, {transform_indices = @transform_1, window_bounds = array<i64: 32, 1>}, {transform_indices = @transform_2, window_bounds = array<i64: 1, 8, 128>}]} {
    %c0_i32 = arith.constant 0 : i32
    %0 = arith.cmpi eq, %arg1, %c0_i32 : i32
    %1 = arith.extui %0 : i1 to i32
    %c0_i32_0 = arith.constant 0 : i32
    %2 = arith.cmpi ne, %1, %c0_i32_0 : i32
    scf.if %2 {
      %cst_23 = arith.constant 0.000000e+00 : f32
      %71 = vector.broadcast %cst_23 : f32 to vector<8x128xf32>
      %c0_24 = arith.constant 0 : index
      %c0_25 = arith.constant 0 : index
      %72 = vector.load %arg5[%c0_24, %c0_25] : memref<8x128xf32, #tpu.memory_space<vmem>>, vector<8x128xf32>
      tpu.vector_store %arg5[%c0_24, %c0_25], %71 {strides = array<i32>} : memref<8x128xf32, #tpu.memory_space<vmem>>, vector<8x128xf32>,
    } else {
    }
    %c0 = arith.constant 0 : index
    %c0_1 = arith.constant 0 : index
    %3 = vector.load %arg2[%c0, %c0_1] : memref<32x16xf32, #tpu.memory_space<vmem>>, vector<32x16xf32>
    %c0_2 = arith.constant 0 : index
    %c0_3 = arith.constant 0 : index
    %4 = vector.load %arg3[%c0_2, %c0_3] : memref<32x1xi32, #tpu.memory_space<vmem>>, vector<32x1xi32>
    %cst = arith.constant dense<0xFF800000> : vector<32xf32>
    %5 = vector.multi_reduction <maximumf>, %3, %cst [1] : vector<32x16xf32> to vector<32xf32>
    %6 = vector.shape_cast %5 : vector<32xf32> to vector<32x1xf32>
    %7 = vector.broadcast %6 : vector<32x1xf32> to vector<32x16xf32>
    %8 = arith.subf %3, %7 : vector<32x16xf32>
    %9 = math.exp %8 : vector<32x16xf32>
    %cst_4 = arith.constant dense<0.000000e+00> : vector<32xf32>
    %10 = vector.multi_reduction <add>, %9, %cst_4 [1] : vector<32x16xf32> to vector<32xf32>
    %11 = vector.shape_cast %10 : vector<32xf32> to vector<32x1xf32>
    %cst_5 = arith.constant 1.000000e+00 : f32
    %12 = vector.broadcast %cst_5 : f32 to vector<32x1xf32>
    %13 = arith.divf %12, %11 : vector<32x1xf32>
    %14 = tpu.iota {dimensions = array<i32: 1>} : vector<32x16xi32>
    %15 = vector.broadcast %6 : vector<32x1xf32> to vector<32x16xf32>
    %16 = arith.cmpf oeq, %3, %15 : vector<32x16xf32>
    %c16_i32 = arith.constant 16 : i32
    %17 = vector.broadcast %c16_i32 : i32 to vector<32x16xi32>
    %18 = arith.select %16, %14, %17 : vector<32x16xi1>, vector<32x16xi32>
    %cst_6 = arith.constant dense<2147483647> : vector<32xi32>
    %19 = vector.multi_reduction <minsi>, %18, %cst_6 [1] : vector<32x16xi32> to vector<32xi32>
    %20 = vector.shape_cast %19 : vector<32xi32> to vector<32x1xi32>
    %21 = arith.cmpi eq, %20, %4 : vector<32x1xi32>
    %22 = arith.extui %21 : vector<32x1xi1> to vector<32x1xi32>
    %23 = arith.sitofp %22 : vector<32x1xi32> to vector<32x1xf32>
    %c1_i32 = arith.constant 1 : i32
    %24 = arith.muli %arg0, %c1_i32 : i32
    %25 = arith.addi %24, %arg1 : i32
    %c32_i32 = arith.constant 32 : i32
    %26 = arith.muli %25, %c32_i32 : i32
    %27 = tpu.iota {dimensions = array<i32: 0>} : vector<32x1xi32>
    %28 = vector.broadcast %26 : i32 to vector<32x1xi32>
    %29 = arith.addi %27, %28 : vector<32x1xi32>
    %c64_i32 = arith.constant 64 : i32
    %30 = vector.broadcast %c64_i32 : i32 to vector<32x1xi32>
    %31 = arith.cmpi slt, %29, %30 : vector<32x1xi32>
    %cst_7 = arith.constant 1.500000e+01 : f32
    %32 = vector.broadcast %cst_7 : f32 to vector<32x1xf32>
    %33 = arith.mulf %13, %32 : vector<32x1xf32>
    %34 = math.ceil %33 : vector<32x1xf32>
    %35 = arith.fptosi %34 : vector<32x1xf32> to vector<32x1xi32>
    %c1_i32_8 = arith.constant 1 : i32
    %36 = vector.broadcast %c1_i32_8 : i32 to vector<32x1xi32>
    %37 = arith.subi %35, %36 : vector<32x1xi32>
    %c0_i32_9 = arith.constant 0 : i32
    %c14_i32 = arith.constant 14 : i32
    %38 = vector.broadcast %c0_i32_9 : i32 to vector<32x1xi32>
    %39 = arith.maxsi %38, %37 : vector<32x1xi32>
    %40 = vector.broadcast %c14_i32 : i32 to vector<32x1xi32>
    %41 = arith.minsi %40, %39 : vector<32x1xi32>
    %c128_i32 = arith.constant 128 : i32
    %42 = vector.broadcast %c128_i32 : i32 to vector<32x1xi32>
    %43 = arith.select %31, %41, %42 : vector<32x1xi1>, vector<32x1xi32>
    %44 = tpu.iota {dimensions = array<i32: 1>} : vector<32x128xi32>
    %45 = vector.broadcast %43 : vector<32x1xi32> to vector<32x128xi32>
    %46 = arith.cmpi eq, %44, %45 : vector<32x128xi32>
    %cst_10 = arith.constant 1.000000e+00 : f32
    %cst_11 = arith.constant 0.000000e+00 : f32
    %47 = vector.broadcast %cst_10 : f32 to vector<32x128xf32>
    %48 = vector.broadcast %cst_11 : f32 to vector<32x128xf32>
    %49 = arith.select %46, %47, %48 : vector<32x128xi1>, vector<32x128xf32>
    %cst_12 = arith.constant dense<0.000000e+00> : vector<128xf32>
    %50 = vector.multi_reduction <add>, %49, %cst_12 [0] : vector<32x128xf32> to vector<128xf32>
    %51 = vector.shape_cast %50 : vector<128xf32> to vector<1x128xf32>
    %cst_13 = arith.constant 0.000000e+00 : f32
    %52 = vector.shape_cast %13 : vector<32x1xf32> to vector<32x1xf32>
    %53 = vector.broadcast %52 : vector<32x1xf32> to vector<32x128xf32>
    %54 = vector.broadcast %cst_13 : f32 to vector<32x128xf32>
    %55 = arith.select %46, %53, %54 : vector<32x128xi1>, vector<32x128xf32>
    %cst_14 = arith.constant dense<0.000000e+00> : vector<128xf32>
    %56 = vector.multi_reduction <add>, %55, %cst_14 [0] : vector<32x128xf32> to vector<128xf32>
    %57 = vector.shape_cast %56 : vector<128xf32> to vector<1x128xf32>
    %cst_15 = arith.constant 0.000000e+00 : f32
    %58 = vector.shape_cast %23 : vector<32x1xf32> to vector<32x1xf32>
    %59 = vector.broadcast %58 : vector<32x1xf32> to vector<32x128xf32>
    %60 = vector.broadcast %cst_15 : f32 to vector<32x128xf32>
    %61 = arith.select %46, %59, %60 : vector<32x128xi1>, vector<32x128xf32>
    %cst_16 = arith.constant dense<0.000000e+00> : vector<128xf32>
    %62 = vector.multi_reduction <add>, %61, %cst_16 [0] : vector<32x128xf32> to vector<128xf32>
    %63 = vector.shape_cast %62 : vector<128xf32> to vector<1x128xf32>
    %c0_17 = arith.constant 0 : index
    %c0_18 = arith.constant 0 : index
    %64 = vector.load %arg5[%c0_17, %c0_18] : memref<8x128xf32, #tpu.memory_space<vmem>>, vector<3x128xf32>
    %65 = tpu.concatenate %51, %57, %63 in 0 : vector<1x128xf32>, vector<1x128xf32>, vector<1x128xf32> -> vector<3x128xf32>
    %66 = arith.addf %64, %65 : vector<3x128xf32>
    %c0_19 = arith.constant 0 : index
    %c0_20 = arith.constant 0 : index
    %67 = vector.load %arg5[%c0_19, %c0_20] : memref<8x128xf32, #tpu.memory_space<vmem>>, vector<3x128xf32>
    tpu.vector_store %arg5[%c0_19, %c0_20], %66 {strides = array<i32>} : memref<8x128xf32, #tpu.memory_space<vmem>>, vector<3x128xf32>,
    %c0_i32_21 = arith.constant 0 : i32
    %68 = arith.cmpi eq, %arg1, %c0_i32_21 : i32
    %69 = arith.extui %68 : i1 to i32
    %c0_i32_22 = arith.constant 0 : i32
    %70 = arith.cmpi ne, %69, %c0_i32_22 : i32
    scf.if %70 {
      %c0_23 = arith.constant 0 : index
      %c0_24 = arith.constant 0 : index
      %71 = vector.load %arg5[%c0_23, %c0_24] : memref<8x128xf32, #tpu.memory_space<vmem>>, vector<8x128xf32>
      %c0_25 = arith.constant 0 : index
      %c0_26 = arith.constant 0 : index
      %c0_27 = arith.constant 0 : index
      %72 = vector.load %arg4[%c0_25, %c0_26, %c0_27] : memref<1x8x128xf32, #tpu.memory_space<vmem>>, vector<1x8x128xf32>
      %73 = vector.shape_cast %72 : vector<1x8x128xf32> to vector<8x128xf32>
      %74 = vector.shape_cast %71 : vector<8x128xf32> to vector<1x8x128xf32>
      tpu.vector_store %arg4[%c0_25, %c0_26, %c0_27], %74 {strides = array<i32>} : memref<1x8x128xf32, #tpu.memory_space<vmem>>, vector<1x8x128xf32>,
    } else {
    }
    return
  }
  func.func @transform_0(%arg0: i32, %arg1: i32) -> (i32, i32) {
    %c1_i32 = arith.constant 1 : i32
    %0 = arith.muli %arg0, %c1_i32 : i32
    %1 = arith.addi %0, %arg1 : i32
    %c0_i32 = arith.constant 0 : i32
    %c0_i32_0 = arith.constant 0 : i32
    return %1, %c0_i32 : i32, i32
  }
  func.func @transform_1(%arg0: i32, %arg1: i32) -> (i32, i32) {
    %c1_i32 = arith.constant 1 : i32
    %0 = arith.muli %arg0, %c1_i32 : i32
    %1 = arith.addi %0, %arg1 : i32
    %c0_i32 = arith.constant 0 : i32
    %c0_i32_0 = arith.constant 0 : i32
    return %1, %c0_i32 : i32, i32
  }
  func.func @transform_2(%arg0: i32, %arg1: i32) -> (i32, i32, i32) {
    %c0_i32 = arith.constant 0 : i32
    %c0_i32_0 = arith.constant 0 : i32
    %c0_i32_1 = arith.constant 0 : i32
    return %arg0, %c0_i32, %c0_i32_0 : i32, i32, i32
  }
}

</mosaic_0001>

<llo_original>
// kernel: tpu_custom_call.1
$region0: #{tpu_custom_call.1}
  #allocation0 [shape = 'u32[]', space=smem, size = 0x4, offset = 0x4, fixed_abs, tag = 'smem constant byte address 0x4 - core index']
  #allocation1 [shape = 'u32[144,128]{1,0:T(1,128)}', space=vmem, size = 0x12000, scoped, tag = 'internal scratch']
  #allocation2 [shape = 'f32[8,128]{1,0:T(8,128)}', space=vmem, size = 0x1000, scoped, tag = 'scratch operand']
  %s0 = inlined_call_operand.vmem [shape: f32[64,16], index: 0, kind: input, shape index: {}]
  %s1 = inlined_call_operand.vmem [shape: s32[64,1], index: 1, kind: input, shape index: {}]
  %s2 = inlined_call_operand.hbm [shape: f32[2,8,128], index: 2, kind: output, shape index: {}]
  %s3 = sld [smem:[#allocation0]]
  $region49: #{tpu_custom_call.1} parent=0
    _
  %s5 = ssub.s32 1, %s3
  %s6 = scalar_select 0, %s5, %s3
  $region1: #{tpu_custom_call.1} parent=0
    #allocation3 [shape = 'u8[8192]{0}', space=vmem, size = 0x2000, scoped, tag = 'output window, operand 0']
    #allocation4 [shape = 's32[2]{0}', space=sflag, size = 0x8, scoped, tag = 'scoped memory for tpu_custom_call.1']
    %7 = vsyncpa [#allocation4], 0
    %s8 = scalar_lea.sflag [#allocation4], 1
    %9 = vsyncpa %s8, 0
    loop: start=0, step=1, limit=4
    $region2: #{tpu_custom_call.1} parent=1 // loop_pre_header
      _
    $region3: #{tpu_custom_call.1} parent=1 // loop_header
      %s11 = sphi 0, %s15
      %p12 = scmp.ge.s32.totalorder %s11, 4
      %s18 = sphi 0, %s30
      %s19 = sphi 0, %s26
      %s20 = sphi 0, %s18
      %s21 = sphi 0, %s19
      %s22 = sphi 0, %s20
      %s23 = sphi 0, %s21
      %s35 = sphi 0, %s37
      %s38 = sphi 0, %s35
      %s39 = sphi 0, %s38
      %s55 = sphi 0, %s39
      %s63 = sphi 0, %s65
      %s66 = sphi 0, %s63
      %s67 = sphi 0, %s66
      %s83 = sphi 0, %s67
      %s89 = sphi 0, %s91
      %s92 = sphi 0, %s89
      %s93 = sphi 0, %s92
      %s109 = sphi 0, %s93
    $region4: #{tpu_custom_call.1} parent=1 // loop_header_branch
      %14 = sbr.rel (%p12) target = $region8
    $region5: #{tpu_custom_call.1} parent=1 // loop_body
      %s16 = ssub.s32 %s11, 1
      %s17 = ssub.s32 %s11, 2
      %s24 = sadd.s32 1, %s19
      %p25 = scmp.ge.s32.totalorder %s24, 1
      %s26 = scalar_select %p25, 0, %s24
      %s27 = sadd.s32 1, %s18
      %s28 = scalar_select %p25, %s27, %s18
      %p29 = scmp.ge.s32.totalorder %s28, 2
      %s30 = scalar_select %p29, 0, %s28
      %s31 = sadd.s32 %s18, %s19
      %s32 = sadd.s32 %s30, %s26
      %s33 = ssub.s32 %s31, %s32
      %p34 = scmp.eq.s32.totalorder %s33, 0
      %s36 = sadd.s32 %s35, 1
      %s37 = scalar_select %p34, %s35, %s36
      %p40 = pneg %p34
      %p41 = scmp.eq.s32.totalorder %s11, 1
      %p42 = por %p40, %p41
      %p43 = scmp.ne.s32.totalorder %s35, %s38
      %p44 = scmp.eq.s32.totalorder %s11, 0
      %p45 = por %p43, %p44
      %p46 = scmp.ne.s32.totalorder %s35, %s38
      %p47 = scmp.eq.s32.totalorder %s16, 1
      %p48 = por %p46, %p47
      %p49 = scmp.ne.s32.totalorder %s38, %s39
      %p50 = scmp.eq.s32.totalorder %s16, 0
      %p51 = por %p49, %p50
      %p52 = scmp.ne.s32.totalorder %s38, %s39
      %p53 = scmp.eq.s32.totalorder %s17, 1
      %p54 = por %p52, %p53
      %p56 = scmp.ne.s32.totalorder %s39, %s55
      %p57 = scmp.eq.s32.totalorder %s17, 0
      %p58 = por %p56, %p57
      %s59 = sadd.s32 %s18, %s19
      %s60 = sadd.s32 %s30, %s26
      %s61 = ssub.s32 %s59, %s60
      %p62 = scmp.eq.s32.totalorder %s61, 0
      %s64 = sadd.s32 %s63, 1
      %s65 = scalar_select %p62, %s63, %s64
      %p68 = pneg %p62
      %p69 = scmp.eq.s32.totalorder %s11, 1
      %p70 = por %p68, %p69
      %p71 = scmp.ne.s32.totalorder %s63, %s66
      %p72 = scmp.eq.s32.totalorder %s11, 0
      %p73 = por %p71, %p72
      %p74 = scmp.ne.s32.totalorder %s63, %s66
      %p75 = scmp.eq.s32.totalorder %s16, 1
      %p76 = por %p74, %p75
      %p77 = scmp.ne.s32.totalorder %s66, %s67
      %p78 = scmp.eq.s32.totalorder %s16, 0
      %p79 = por %p77, %p78
      %p80 = scmp.ne.s32.totalorder %s66, %s67
      %p81 = scmp.eq.s32.totalorder %s17, 1
      %p82 = por %p80, %p81
      %p84 = scmp.ne.s32.totalorder %s67, %s83
      %p85 = scmp.eq.s32.totalorder %s17, 0
      %p86 = por %p84, %p85
      %s87 = ssub.s32 %s18, %s30
      %p88 = scmp.eq.s32.totalorder %s87, 0
      %s90 = sadd.s32 %s89, 1
      %s91 = scalar_select %p88, %s89, %s90
      %p94 = pneg %p88
      %p95 = scmp.eq.s32.totalorder %s11, 1
      %p96 = por %p94, %p95
      %p97 = scmp.ne.s32.totalorder %s89, %s92
      %p98 = scmp.eq.s32.totalorder %s11, 0
      %p99 = por %p97, %p98
      %p100 = scmp.ne.s32.totalorder %s89, %s92
      %p101 = scmp.eq.s32.totalorder %s16, 1
      %p102 = por %p100, %p101
      %p103 = scmp.ne.s32.totalorder %s92, %s93
      %p104 = scmp.eq.s32.totalorder %s16, 0
      %p105 = por %p103, %p104
      %p106 = scmp.ne.s32.totalorder %s92, %s93
      %p107 = scmp.eq.s32.totalorder %s17, 1
      %p108 = por %p106, %p107
      %p110 = scmp.ne.s32.totalorder %s93, %s109
      %p111 = scmp.eq.s32.totalorder %s17, 0
      %p112 = por %p110, %p111
      %p113 = scmp.le.s32.totalorder 1, %s11
      %p114 = scmp.lt.s32.totalorder %s11, 3
      %p115 = pnand %p113, %p114
      %p116 = pneg %p115
      // Predicated region
      $region9: #{tpu_custom_call.1} parent=5 // pred_check
        _
      $region10: #{tpu_custom_call.1} parent=5 // pred_check_branch
        %118 = sbr.rel (%p115) target = $region12
      $region11: #{tpu_custom_call.1} parent=5 // pred_region
        %s119 = ssub.s32 %s11, 1
      $region12: #{tpu_custom_call.1} parent=5 // pred_fallthru
        _
      %p120 = scmp.lt.s32.totalorder %s11, 2
      // Predicated region
      $region13: #{tpu_custom_call.1} parent=5 // pred_check
        %p121 = pneg %p120
      $region14: #{tpu_custom_call.1} parent=5 // pred_check_branch
        %123 = sbr.rel (%p121) target = $region16
      $region15: #{tpu_custom_call.1} parent=5 // pred_region
        // Predicated region
        $region17: #{tpu_custom_call.1} parent=15 // pred_check
          %p124 = pneg %p45
        $region18: #{tpu_custom_call.1} parent=15 // pred_check_branch
          %126 = sbr.rel (%p124) target = $region20
        $region19: #{tpu_custom_call.1} parent=15 // pred_region
          %s127 = sadd.s32 %s18, %s19
          %s128 = smul.u32 4, %s127
          %p129 = scmp.lt.s32.totalorder %s128, 7
          %s130 = scalar_select %p129, %s128, 7
          %s131 = smul.addr %s130, 8
          %s132 = scalar_lea.vmem %s0, %s131
          %s133 = sadd.s32 %s18, %s19
          %s134 = smul.u32 4, %s133
        $region20: #{tpu_custom_call.1} parent=15 // pred_fallthru
          _
        // Predicated region
        $region21: #{tpu_custom_call.1} parent=15 // pred_check
          %p135 = pneg %p73
        $region22: #{tpu_custom_call.1} parent=15 // pred_check_branch
          %137 = sbr.rel (%p135) target = $region24
        $region23: #{tpu_custom_call.1} parent=15 // pred_region
          %s138 = sadd.s32 %s18, %s19
          %s139 = smul.u32 4, %s138
          %p140 = scmp.lt.s32.totalorder %s139, 7
          %s141 = scalar_select %p140, %s139, 7
          %s142 = smul.addr %s141, 8
          %s143 = scalar_lea.vmem %s1, %s142
          %s144 = sadd.s32 %s18, %s19
          %s145 = smul.u32 4, %s144
        $region24: #{tpu_custom_call.1} parent=15 // pred_fallthru
          _
      $region16: #{tpu_custom_call.1} parent=5 // pred_fallthru
        _
      %p146 = scmp.le.s32.totalorder 1, %s11
      %p147 = scmp.lt.s32.totalorder %s11, 3
      %p148 = pnand %p146, %p147
      %p149 = pneg %p148
      // Predicated region
      $region25: #{tpu_custom_call.1} parent=5 // pred_check
        _
      $region26: #{tpu_custom_call.1} parent=5 // pred_check_branch
        %151 = sbr.rel (%p148) target = $region28
      $region27: #{tpu_custom_call.1} parent=5 // pred_region
        %s152 = ssub.s32 %s11, 1
        %s153 = sadd.s32 %s20, %s21
        %s154 = smul.u32 4, %s153
        %p155 = scmp.lt.s32.totalorder %s154, 7
        %s156 = scalar_select %p155, %s154, 7
        %s157 = smul.addr %s156, 8
        %s158 = scalar_lea.vmem %s0, %s157
        %p159 = pneg %p51
        %p160 = pneg %p48
        %s161 = sadd.s32 %s20, %s21
        %s162 = smul.u32 4, %s161
        %p163 = scmp.lt.s32.totalorder %s162, 7
        %s164 = scalar_select %p163, %s162, 7
        %s165 = smul.addr %s164, 8
        %s166 = scalar_lea.vmem %s1, %s165
        %p167 = pneg %p79
        %p168 = pneg %p76
        %p169 = pneg %p105
        %p170 = pneg %p102
        %s171 = sand.u32 %s92, 1
        %s172 = scalar_lea.sflag [#allocation4], %s171
        %s173 = sand.u32 %s92, 1
        %s174 = smul.addr %s173, 8
        %s175 = scalar_lea.vmem [#allocation3], %s174
        %s176 = sadd.s32 %s20, %s21
        %s177 = smul.u32 4, %s176
        %p178 = scmp.lt.s32.totalorder %s177, 7
        %s179 = scalar_select %p178, %s177, 7
        %s180 = smul.addr %s179, 8
        %s181 = scalar_lea.vmem %s0, %s180
        %s182 = sadd.s32 %s20, %s21
        %s183 = smul.u32 4, %s182
        %s184 = sadd.s32 %s20, %s21
        %s185 = smul.u32 4, %s184
        %p186 = scmp.lt.s32.totalorder %s185, 7
        %s187 = scalar_select %p186, %s185, 7
        %s188 = smul.addr %s187, 8
        %s189 = scalar_lea.vmem %s1, %s188
        %s190 = sadd.s32 %s20, %s21
        %s191 = smul.u32 4, %s190
        %p192 = scmp.eq.s32.totalorder %s21, 0
        // Predicated region
        $region29: #{tpu_custom_call.1} parent=27 // pred_check
          %p193 = pneg %p192
        $region30: #{tpu_custom_call.1} parent=27 // pred_check_branch
          %195 = sbr.rel (%p193) target = $region32
        $region31: #{tpu_custom_call.1} parent=27 // pred_region
          %196 = vst [vmem:[#allocation2] sm:$0xff] 0.0
        $region32: #{tpu_custom_call.1} parent=27 // pred_fallthru
          _
        %v197 = vld [vmem:[%s181] sm:$0xff]
        %v198 = vld [vmem:[%s181 + $0x8] sm:$0xff]
        %v199 = vld [vmem:[%s181 + $0x10] sm:$0xff]
        %v200 = vld [vmem:[%s181 + $0x18] sm:$0xff]
        %v201 = vld [vmem:[%s189] sm:$0xff]
        %v202 = vld [vmem:[%s189 + $0x8] sm:$0xff]
        %v203 = vld [vmem:[%s189 + $0x10] sm:$0xff]
        %v204 = vld [vmem:[%s189 + $0x18] sm:$0xff]
        %vm205 = vcmask 130048
        %v206 = vsel %vm205, %v197, -inf
        %207 = vmax.xlane.f32.xlu0 %v206
        %v208 = vpop.xlane.xlu0 %207
        %v209 = vsel %vm205, %v198, -inf
        %210 = vmax.xlane.f32.xlu0 %v209
        %v211 = vpop.xlane.xlu0 %210
        %v212 = vsel %vm205, %v199, -inf
        %213 = vmax.xlane.f32.xlu0 %v212
        %v214 = vpop.xlane.xlu0 %213
        %v215 = vsel %vm205, %v200, -inf
        %216 = vmax.xlane.f32.xlu0 %v215
        %v217 = vpop.xlane.xlu0 %216
        %v218 = vsub.f32 %v197, %v208
        %v219 = vsub.f32 %v198, %v211
        %v220 = vsub.f32 %v199, %v214
        %v221 = vsub.f32 %v200, %v217
        %v222 = vmul.f32 %v218, 1.442695
        %v223 = vpow.pop %v222
        %v224 = vmul.f32 %v219, 1.442695
        %v225 = vpow.pop %v224
        %v226 = vmul.f32 %v220, 1.442695
        %v227 = vpow.pop %v226
        %v228 = vmul.f32 %v221, 1.442695
        %v229 = vpow.pop %v228
        %v230 = vsel %vm205, %v223, 0.0
        %231 = vadd.xlane.f32.xlu0 %v230
        %v232 = vpop.xlane.xlu0 %231
        %v233 = vsel %vm205, %v225, 0.0
        %234 = vadd.xlane.f32.xlu0 %v233
        %v235 = vpop.xlane.xlu0 %234
        %v236 = vsel %vm205, %v227, 0.0
        %237 = vadd.xlane.f32.xlu0 %v236
        %v238 = vpop.xlane.xlu0 %237
        %v239 = vsel %vm205, %v229, 0.0
        %240 = vadd.xlane.f32.xlu0 %v239
        %v241 = vpop.xlane.xlu0 %240
        %v242 = vrcp.pop %v232
        %v243 = vmul.f32 1.0, %v242
        %v244 = vrcp.pop %v235
        %v245 = vmul.f32 1.0, %v244
        %v246 = vrcp.pop %v238
        %v247 = vmul.f32 1.0, %v246
        %v248 = vrcp.pop %v241
        %v249 = vmul.f32 1.0, %v248
        %v250 = vlaneseq
        %v251 = vand.u32 %v250, 127
        %vm252 = vcmp.eq.f32.partialorder %v197, %v208
        %vm253 = vcmp.eq.f32.partialorder %v198, %v211
        %vm254 = vcmp.eq.f32.partialorder %v199, %v214
        %vm255 = vcmp.eq.f32.partialorder %v200, %v217
        %v256 = vsel %vm252, %v251, 16
        %v257 = vsel %vm253, %v251, 16
        %v258 = vsel %vm254, %v251, 16
        %v259 = vsel %vm255, %v251, 16
        %v260 = vsel %vm205, %v256, 2147483647
        %v261 = vand.u32 %v260, 65535
        %v262 = vshra.s32 %v260, 16
        %v263 = vcvt.s32.f32 %v261
        %v264 = vcvt.s32.f32 %v262
        %265 = vmin.xlane.f32.xlu0 %v264
        %v266 = vpop.xlane.xlu0 %265
        %vm267 = vcmp.eq.f32.partialorder %v264, %v266
        %v268 = vsel %vm267, %v263, inf
        %269 = vmin.xlane.f32.xlu0 %v268
        %v270 = vpop.xlane.xlu0 %269
        %v271 = vcvt.f32.s32 %v270
        %v272 = vcvt.f32.s32 %v266
        %v273 = vshll.u32 %v272, 16
        %v274 = vadd.s32 %v273, %v271
        %v275 = vsel %vm205, %v257, 2147483647
        %v276 = vand.u32 %v275, 65535
        %v277 = vshra.s32 %v275, 16
        %v278 = vcvt.s32.f32 %v276
        %v279 = vcvt.s32.f32 %v277
        %280 = vmin.xlane.f32.xlu0 %v279
        %v281 = vpop.xlane.xlu0 %280
        %vm282 = vcmp.eq.f32.partialorder %v279, %v281
        %v283 = vsel %vm282, %v278, inf
        %284 = vmin.xlane.f32.xlu0 %v283
        %v285 = vpop.xlane.xlu0 %284
        %v286 = vcvt.f32.s32 %v285
        %v287 = vcvt.f32.s32 %v281
        %v288 = vshll.u32 %v287, 16
        %v289 = vadd.s32 %v288, %v286
        %v290 = vsel %vm205, %v258, 2147483647
        %v291 = vand.u32 %v290, 65535
        %v292 = vshra.s32 %v290, 16
        %v293 = vcvt.s32.f32 %v291
        %v294 = vcvt.s32.f32 %v292
        %295 = vmin.xlane.f32.xlu0 %v294
        %v296 = vpop.xlane.xlu0 %295
        %vm297 = vcmp.eq.f32.partialorder %v294, %v296
        %v298 = vsel %vm297, %v293, inf
        %299 = vmin.xlane.f32.xlu0 %v298
        %v300 = vpop.xlane.xlu0 %299
        %v301 = vcvt.f32.s32 %v300
        %v302 = vcvt.f32.s32 %v296
        %v303 = vshll.u32 %v302, 16
        %v304 = vadd.s32 %v303, %v301
        %v305 = vsel %vm205, %v259, 2147483647
        %v306 = vand.u32 %v305, 65535
        %v307 = vshra.s32 %v305, 16
        %v308 = vcvt.s32.f32 %v306
        %v309 = vcvt.s32.f32 %v307
        %310 = vmin.xlane.f32.xlu0 %v309
        %v311 = vpop.xlane.xlu0 %310
        %vm312 = vcmp.eq.f32.partialorder %v309, %v311
        %v313 = vsel %vm312, %v308, inf
        %314 = vmin.xlane.f32.xlu0 %v313
        %v315 = vpop.xlane.xlu0 %314
        %v316 = vcvt.f32.s32 %v315
        %v317 = vcvt.f32.s32 %v311
        %v318 = vshll.u32 %v317, 16
        %v319 = vadd.s32 %v318, %v316
        %vm320 = vcmp.eq.s32.totalorder %v274, %v201
        %vm321 = vcmp.eq.s32.totalorder %v289, %v202
        %vm322 = vcmp.eq.s32.totalorder %v304, %v203
        %vm323 = vcmp.eq.s32.totalorder %v319, %v204
        %v324 = vsel %vm320, 1, 0
        %v325 = vsel %vm321, 1, 0
        %v326 = vsel %vm322, 1, 0
        %v327 = vsel %vm323, 1, 0
        %v328 = vcvt.s32.f32 %v324
        %v329 = vcvt.s32.f32 %v325
        %v330 = vcvt.s32.f32 %v326
        %v331 = vcvt.s32.f32 %v327
        %s332 = sadd.s32 %s20, %s21
        %s333 = smul.u32 %s332, 32
        %v334 = vlaneseq
        %v335 = vshrl.u32 %v334, 7
        %v336 = vadd.s32 %v335, 8
        %v337 = vadd.s32 %v335, 16
        %v338 = vadd.s32 %v335, 24
        %v339 = vstv %s333
        %v340 = vadd.s32 %v335, %v339
        %v341 = vadd.s32 %v336, %v339
        %v342 = vadd.s32 %v337, %v339
        %v343 = vadd.s32 %v338, %v339
        %vm344 = vcmp.lt.s32.totalorder %v340, 64
        %vm345 = vcmp.lt.s32.totalorder %v341, 64
        %vm346 = vcmp.lt.s32.totalorder %v342, 64
        %vm347 = vcmp.lt.s32.totalorder %v343, 64
        %v348 = vmul.f32 %v243, 15.0
        %v349 = vmul.f32 %v245, 15.0
        %v350 = vmul.f32 %v247, 15.0
        %v351 = vmul.f32 %v249, 15.0
        %v352 = vceil.f32 %v348
        %v353 = vceil.f32 %v349
        %v354 = vceil.f32 %v350
        %v355 = vceil.f32 %v351
        %v356 = vcvt.f32.s32.to.zero.pseudo %v352
        %v357 = vcvt.f32.s32.to.zero.pseudo %v353
        %v358 = vcvt.f32.s32.to.zero.pseudo %v354
        %v359 = vcvt.f32.s32.to.zero.pseudo %v355
        %v360 = vsub.s32 %v356, 1
        %v361 = vsub.s32 %v357, 1
        %v362 = vsub.s32 %v358, 1
        %v363 = vsub.s32 %v359, 1
        %vm364 = vcmp.gt.s32.totalorder %v360, 0
        %v365 = vsel %vm364, %v360, 0
        %vm366 = vcmp.gt.s32.totalorder %v361, 0
        %v367 = vsel %vm366, %v361, 0
        %vm368 = vcmp.gt.s32.totalorder %v362, 0
        %v369 = vsel %vm368, %v362, 0
        %vm370 = vcmp.gt.s32.totalorder %v363, 0
        %v371 = vsel %vm370, %v363, 0
        %vm372 = vcmp.lt.s32.totalorder %v365, 14
        %v373 = vsel %vm372, %v365, 14
        %vm374 = vcmp.lt.s32.totalorder %v367, 14
        %v375 = vsel %vm374, %v367, 14
        %vm376 = vcmp.lt.s32.totalorder %v369, 14
        %v377 = vsel %vm376, %v369, 14
        %vm378 = vcmp.lt.s32.totalorder %v371, 14
        %v379 = vsel %vm378, %v371, 14
        %v380 = vsel %vm344, %v373, 128
        %v381 = vsel %vm345, %v375, 128
        %v382 = vsel %vm346, %v377, 128
        %v383 = vsel %vm347, %v379, 128
        %vm384 = vcmp.eq.s32.totalorder %v251, %v380
        %vm385 = vcmp.eq.s32.totalorder %v251, %v381
        %vm386 = vcmp.eq.s32.totalorder %v251, %v382
        %vm387 = vcmp.eq.s32.totalorder %v251, %v383
        %v388 = vsel %vm384, 1.0, 0.0
        %v389 = vsel %vm385, 1.0, 0.0
        %v390 = vsel %vm386, 1.0, 0.0
        %v391 = vsel %vm387, 1.0, 0.0
        %v392 = vadd.f32 %v388, %v389
        %v393 = vadd.f32 %v392, %v390
        %v394 = vadd.f32 %v393, %v391
        %v395 = vrot.slane %v394, 4
        %v396 = vadd.f32 %v394, %v395
        %v397 = vrot.slane %v396, 2
        %v398 = vadd.f32 %v396, %v397
        %v399 = vrot.slane %v398, 1
        %v400 = vadd.f32 %v398, %v399
        %v401 = vsel %vm384, %v243, 0.0
        %v402 = vsel %vm385, %v245, 0.0
        %v403 = vsel %vm386, %v247, 0.0
        %v404 = vsel %vm387, %v249, 0.0
        %v405 = vadd.f32 %v401, %v402
        %v406 = vadd.f32 %v405, %v403
        %v407 = vadd.f32 %v406, %v404
        %v408 = vrot.slane %v407, 4
        %v409 = vadd.f32 %v407, %v408
        %v410 = vrot.slane %v409, 2
        %v411 = vadd.f32 %v409, %v410
        %v412 = vrot.slane %v411, 1
        %v413 = vadd.f32 %v411, %v412
        %415 = vset.pattern.permute.xlu0 0
        %416 = vperm.xlu0 %415, %v328
        %v417 = vpop.permute.xlu0 %416
        %420 = vset.pattern.permute.xlu0 0
        %421 = vperm.xlu0 %420, %v329
        %v422 = vpop.permute.xlu0 %421
        %425 = vset.pattern.permute.xlu0 0
        %426 = vperm.xlu0 %425, %v330
        %v427 = vpop.permute.xlu0 %426
        %430 = vset.pattern.permute.xlu0 0
        %431 = vperm.xlu0 %430, %v331
        %v432 = vpop.permute.xlu0 %431
        %v434 = vsel %vm384, %v417, 0.0
        %v435 = vsel %vm385, %v422, 0.0
        %v436 = vsel %vm386, %v427, 0.0
        %v437 = vsel %vm387, %v432, 0.0
        %v438 = vadd.f32 %v434, %v435
        %v439 = vadd.f32 %v438, %v436
        %v440 = vadd.f32 %v439, %v437
        %v441 = vrot.slane %v440, 4
        %v442 = vadd.f32 %v440, %v441
        %v443 = vrot.slane %v442, 2
        %v444 = vadd.f32 %v442, %v443
        %v445 = vrot.slane %v444, 1
        %v446 = vadd.f32 %v444, %v445
        %v447 = vld [vmem:[#allocation2] sm:$0x7]
        %vm448 = vcmask 1040384
        %v449 = vsel %vm448, %v400, %v413
        %vm450 = vcmask 1041408
        %v451 = vsel %vm450, %v449, %v446
        %v452 = vadd.f32 %v447, %v451
        %453 = vst [vmem:[#allocation2] sm:$0x7] %v452
        // Predicated region
        $region33: #{tpu_custom_call.1} parent=27 // pred_check
          %p454 = pneg %p192
        $region34: #{tpu_custom_call.1} parent=27 // pred_check_branch
          %456 = sbr.rel (%p454) target = $region36
        $region35: #{tpu_custom_call.1} parent=27 // pred_region
          %v457 = vld [vmem:[#allocation2] sm:$0xff]
          %458 = vst [vmem:[%s175] sm:$0xff] %v457
        $region36: #{tpu_custom_call.1} parent=27 // pred_fallthru
          _
        %s459 = sand.u32 %s92, 1
        %s460 = scalar_lea.sflag [#allocation4], %s459
        %s461 = sand.u32 %s92, 1
        %s462 = smul.addr %s461, 8
        %s463 = scalar_lea.vmem [#allocation3], %s462
        // Predicated region
        $region37: #{tpu_custom_call.1} parent=27 // pred_check
          %p464 = pneg %p102
        $region38: #{tpu_custom_call.1} parent=27 // pred_check_branch
          %466 = sbr.rel (%p464) target = $region40
        $region39: #{tpu_custom_call.1} parent=27 // pred_region
          %s468 = ssub.s32 128, 128
          %469 = vsyncadd %s460, %s468
          %s470 = smul.addr %s20, 128
          %s471 = scalar_lea.hbm %s2, %s470
          %s473 = sshll.u32 %s463, 4
          %s474 = int_to_ptr.vmem [resolvable:$true] %s473
          %476 = dma.vmem_to_hbm [thread:$0]  %s474, 128, %s471, %s460
        $region40: #{tpu_custom_call.1} parent=27 // pred_fallthru
          _
      $region28: #{tpu_custom_call.1} parent=5 // pred_fallthru
        _
      %p477 = scmp.le.s32.totalorder 2, %s11
      // Predicated region
      $region41: #{tpu_custom_call.1} parent=5 // pred_check
        %p478 = pneg %p477
      $region42: #{tpu_custom_call.1} parent=5 // pred_check_branch
        %480 = sbr.rel (%p478) target = $region44
      $region43: #{tpu_custom_call.1} parent=5 // pred_region
        %s481 = ssub.s32 %s11, 2
        // Predicated region
        $region45: #{tpu_custom_call.1} parent=43 // pred_check
          %p482 = pneg %p108
        $region46: #{tpu_custom_call.1} parent=43 // pred_check_branch
          %484 = sbr.rel (%p482) target = $region48
        $region47: #{tpu_custom_call.1} parent=43 // pred_region
          %s485 = sand.u32 %s93, 1
          %s486 = scalar_lea.sflag [#allocation4], %s485
          %s487 = sand.u32 %s93, 1
          %s488 = smul.addr %s487, 8
          %s489 = scalar_lea.vmem [#allocation3], %s488
          %490 = dma.done %s486, 128
        $region48: #{tpu_custom_call.1} parent=43 // pred_fallthru
          _
      $region44: #{tpu_custom_call.1} parent=5 // pred_fallthru
        _
    $region6: #{tpu_custom_call.1} parent=1 // loop_footer
      %s15 = sadd.s32 1, %s11
    $region7: #{tpu_custom_call.1} parent=1 // loop_footer_branch
      %10 = sbr.rel target = $region3
    $region8: #{tpu_custom_call.1} parent=1 // loop_exit
      _
    %491 = vsyncpa [#allocation4], 1
    %s492 = scalar_lea.sflag [#allocation4], 1
    %493 = vsyncpa %s492, 1

</llo_original>
